<compile_context>
chip_gen: v5e
topology: v5e:2x2
jax: 0.10.0
libtpu: 0.0.40
codegen_flags: <defaults>
</compile_context>

<pallas_src>
import math
import jax
import jax.numpy as jnp
from jax import lax
from jax.experimental import pallas as pl
from jax.experimental.pallas import tpu as pltpu


def _ffb_kernel(x_ref, m1_ref, b1_ref, m2_ref, mo_ref, bo_ref, out_ref):
    # x_ref:   (1, H, W*C)      lane-dense input slab (one batch element), f32
    # m1/m2:   (3*W*C, W*C)     K-stacked block-banded 3x3 conv weights, bf16
    # b1_ref:  (1, W*C)         conv1 bias tiled per pixel, f32
    # mo_ref:  (W*C, W*Cout)    block-diagonal 1x1 out-conv weight, bf16
    # bo_ref:  (1, W*Cout)      folded bias (b2 @ wo + bo) tiled per pixel, f32
    # out_ref: (1, H, W*Cout)   f32
    H = x_ref.shape[1]
    x = x_ref[0]                                        # (H, W*C), pre-ReLU residual source
    row = lax.broadcasted_iota(jnp.int32, x.shape, 0)   # 2D iota (TPU requirement)

    def shifted_cat(a):
        # ky=0 operand: rows [0, a[0], ..., a[H-2]]  (roll toward higher rows, zero top)
        dn = jnp.where(row == 0, 0.0, pltpu.roll(a, shift=1, axis=0))
        # ky=2 operand: rows [a[1], ..., a[H-1], 0]  (roll by H-1 == -1, zero bottom)
        up = jnp.where(row == H - 1, 0.0, pltpu.roll(a, shift=H - 1, axis=0))
        # lane-axis concat -> (H, 3*W*C); single K=3*W*C MXU push per conv
        return jnp.concatenate([dn, a, up], axis=1).astype(jnp.bfloat16)

    # ---- conv1: relu(x) -> fused 3x3 band matmul, + bias, relu ----
    r = jnp.maximum(x, 0.0)
    acc = jnp.dot(shifted_cat(r), m1_ref[...], preferred_element_type=jnp.float32)
    h1 = jnp.maximum(acc + b1_ref[...], 0.0)

    # ---- conv2 (its bias is folded into the 1x1 output conv) ----
    acc2 = jnp.dot(shifted_cat(h1), m2_ref[...], preferred_element_type=jnp.float32)

    # ---- residual add (pre-ReLU x) + 1x1 out conv: lane-dense (H, W*Cout) store ----
    res = (acc2 + x).astype(jnp.bfloat16)
    out = jnp.dot(res, mo_ref[...], preferred_element_type=jnp.float32) + bo_ref[...]
    out_ref[0] = out


def _band_matrices_stacked(w_hwio, W):
    """w_hwio: (3, 3, Cin, Cout) conv weight (HWIO).

    Returns (3*W*Cin, W*Cout): for each ky a block-banded matrix M[ky] such that,
    with rows laid out lane-dense as [w, c],
        out[h] = sum_ky  x_padH[h + ky] @ M[ky],
    stacked along K in ky order 0,1,2 (matching the kernel's [dn, mid, up] concat).
    The kx taps and W-direction zero padding are folded into the band structure.
    """
    mats = []
    for ky in range(3):
        m = sum(jnp.kron(jnp.eye(W, k=1 - kx, dtype=w_hwio.dtype), w_hwio[ky, kx])
                for kx in range(3))
        mats.append(m)
    return jnp.concatenate(mats, axis=0)


def feature_fusion_block(x_nhwc, params):
    """x_nhwc: (B, H, W, C) float32. Returns (B, H, W, Cout)."""
    B, H, W, C = x_nhwc.shape
    w1, b1, w2, b2, wo, bo = params
    Cout = wo.shape[-1]
    WC, WCo = W * C, W * Cout
    # lane-dense assumption used throughout (unmasked vst, aligned vld)
    assert WC % 128 == 0 and WCo % 128 == 0, "W*C and W*Cout must be multiples of 128"
    assert H % 8 == 0, "H must be a multiple of 8 (sublane alignment)"

    # One-time wrapper-side weight re-packing (pure JAX, outside the kernel).
    # Fold b2 into the out-conv bias in f32 BEFORE any bf16 cast.
    m1 = _band_matrices_stacked(w1, W).astype(jnp.bfloat16)       # (3*W*C, W*C)
    m2 = _band_matrices_stacked(w2, W).astype(jnp.bfloat16)       # (3*W*C, W*C)
    mo = jnp.kron(jnp.eye(W, dtype=wo.dtype), wo).astype(jnp.bfloat16)  # (W*C, W*Cout)
    b1_row = jnp.tile(b1.reshape(1, C), (1, W)).astype(jnp.float32)          # (1, W*C)
    bo_row = jnp.tile((b2 @ wo + bo).reshape(1, Cout), (1, W)).astype(jnp.float32)

    x_slab = x_nhwc.reshape(B, H, WC)

    grid_spec = pltpu.PrefetchScalarGridSpec(
        num_scalar_prefetch=0,
        grid=(B,),
        in_specs=[
            pl.BlockSpec((1, H, WC), lambda b: (b, 0, 0)),
            pl.BlockSpec((3 * WC, WC), lambda b: (0, 0)),
            pl.BlockSpec((1, WC), lambda b: (0, 0)),
            pl.BlockSpec((3 * WC, WC), lambda b: (0, 0)),
            pl.BlockSpec((WC, WCo), lambda b: (0, 0)),
            pl.BlockSpec((1, WCo), lambda b: (0, 0)),
        ],
        out_specs=pl.BlockSpec((1, H, WCo), lambda b: (b, 0, 0)),
    )

    out_slab = pl.pallas_call(
        _ffb_kernel,
        out_shape=jax.ShapeDtypeStruct((B, H, WCo), jnp.float32),
        grid_spec=grid_spec,
        compiler_params=pltpu.CompilerParams(
            dimension_semantics=("parallel",)),
    )(x_slab, m1, b1_row, m2, mo, bo_row)

    return out_slab.reshape(B, H, W, Cout)


def init_params(key, features, out_features):
    """Conv weights ~ N(0, sqrt(2/(k*k*out_ch))) as in weights_init (HWIO layout).

    weights_init zeroes the biases; small random biases are used here so the
    kernel's bias handling (incl. the b2 fold) is actually exercised — the
    forward-pass semantics are unchanged.
    """
    k1, k2, k3, k4, k5, k6 = jax.random.split(key, 6)
    std3 = math.sqrt(2.0 / (3 * 3 * features))
    std1 = math.sqrt(2.0 / (1 * 1 * out_features))
    w1 = (jax.random.normal(k1, (3, 3, features, features)) * std3).astype(jnp.float32)
    w2 = (jax.random.normal(k2, (3, 3, features, features)) * std3).astype(jnp.float32)
    wo = (jax.random.normal(k3, (features, out_features)) * std1).astype(jnp.float32)
    b1 = (jax.random.normal(k4, (features,)) * 0.1).astype(jnp.float32)
    b2 = (jax.random.normal(k5, (features,)) * 0.1).astype(jnp.float32)
    bo = (jax.random.normal(k6, (out_features,)) * 0.1).astype(jnp.float32)
    return (w1, b1, w2, b2, wo, bo)


def reference_forward(x_nhwc, params):
    """Pure-JAX reference (lax.conv, f32) for verification."""
    w1, b1, w2, b2, wo, bo = params
    dn = ("NHWC", "HWIO", "NHWC")
    out = jnp.maximum(x_nhwc, 0.0)
    out = lax.conv_general_dilated(out, w1, (1, 1), "SAME", dimension_numbers=dn) + b1
    out = jnp.maximum(out, 0.0)
    out = lax.conv_general_dilated(out, w2, (1, 1), "SAME", dimension_numbers=dn) + b2
    out = out + x_nhwc
    out = jnp.einsum("bhwc,co->bhwo", out, wo) + bo
    return out


if __name__ == "__main__":
    key = jax.random.PRNGKey(0)
    kx_, kp = jax.random.split(key)

    B, C, H, W = 2, 8, 16, 16          # features = 8  ->  W*C = 128 (lane-dense)
    out_features = 8

    # PyTorch-convention NCHW input, converted to NHWC for the kernel
    x_nchw = jax.random.normal(kx_, (B, C, H, W), dtype=jnp.float32)
    x_nhwc = jnp.transpose(x_nchw, (0, 2, 3, 1))

    params = init_params(kp, C, out_features)

    out_nhwc = feature_fusion_block(x_nhwc, params)
    out_nhwc = jax.block_until_ready(out_nhwc)

    # sanity check against a pure-JAX f32 reference (bf16 matmul operands in kernel)
    ref = reference_forward(x_nhwc, params)
    assert out_nhwc.shape == (B, H, W, out_features)
    assert jnp.allclose(out_nhwc, ref, atol=5e-2, rtol=5e-2), (
        "max abs err = %g" % float(jnp.max(jnp.abs(out_nhwc - ref))))

    # module returns NCHW
    out_nchw = jnp.transpose(out_nhwc, (0, 3, 1, 2))
    jax.block_until_ready(out_nchw)

    print("KERNEL_OK")
</pallas_src>

<mosaic_0001>
module attributes {stable_mosaic.version = 11 : i64} {
  func.func @_ffb_kernel(%arg0: i32, %arg1: memref<1x16x128xf32, #tpu.memory_space<vmem>>, %arg2: memref<384x128xbf16, #tpu.memory_space<vmem>>, %arg3: memref<1x128xf32, #tpu.memory_space<vmem>>, %arg4: memref<384x128xbf16, #tpu.memory_space<vmem>>, %arg5: memref<128x128xbf16, #tpu.memory_space<vmem>>, %arg6: memref<1x128xf32, #tpu.memory_space<vmem>>, %arg7: memref<1x16x128xf32, #tpu.memory_space<vmem>>) attributes {dimension_semantics = [#tpu.dimension_semantics<parallel>], iteration_bounds = array<i64: 2>, scalar_prefetch = 0 : i64, scratch_operands = 0 : i64, tpu.core_type = #tpu.core_type<tc>, window_params = [{transform_indices = @transform_0, window_bounds = array<i64: 1, 16, 128>}, {pipeline_mode = #tpu.pipeline_mode<synchronous>, transform_indices = @transform_1, window_bounds = array<i64: 384, 128>}, {pipeline_mode = #tpu.pipeline_mode<synchronous>, transform_indices = @transform_2, window_bounds = array<i64: 1, 128>}, {pipeline_mode = #tpu.pipeline_mode<synchronous>, transform_indices = @transform_3, window_bounds = array<i64: 384, 128>}, {pipeline_mode = #tpu.pipeline_mode<synchronous>, transform_indices = @transform_4, window_bounds = array<i64: 128, 128>}, {pipeline_mode = #tpu.pipeline_mode<synchronous>, transform_indices = @transform_5, window_bounds = array<i64: 1, 128>}, {transform_indices = @transform_6, window_bounds = array<i64: 1, 16, 128>}]} {
    %c0 = arith.constant 0 : index
    %c0_0 = arith.constant 0 : index
    %c0_1 = arith.constant 0 : index
    %0 = vector.load %arg1[%c0, %c0_0, %c0_1] : memref<1x16x128xf32, #tpu.memory_space<vmem>>, vector<1x16x128xf32>
    %1 = vector.shape_cast %0 : vector<1x16x128xf32> to vector<16x128xf32>
    %2 = tpu.iota {dimensions = array<i32: 0>} : vector<16x128xi32>
    %cst = arith.constant 0.000000e+00 : f32
    %3 = vector.broadcast %cst : f32 to vector<16x128xf32>
    %4 = arith.maximumf %1, %3 : vector<16x128xf32>
    %c0_i32 = arith.constant 0 : i32
    %5 = vector.broadcast %c0_i32 : i32 to vector<16x128xi32>
    %6 = arith.cmpi eq, %2, %5 : vector<16x128xi32>
    %c1_i32 = arith.constant 1 : i32
    %7 = tpu.dynamic_rotate %4 by %c1_i32 dim 0 : vector<16x128xf32>, i32 -> vector<16x128xf32>
    %cst_2 = arith.constant 0.000000e+00 : f32
    %8 = vector.broadcast %cst_2 : f32 to vector<16x128xf32>
    %9 = arith.select %6, %8, %7 : vector<16x128xi1>, vector<16x128xf32>
    %c15_i32 = arith.constant 15 : i32
    %10 = vector.broadcast %c15_i32 : i32 to vector<16x128xi32>
    %11 = arith.cmpi eq, %2, %10 : vector<16x128xi32>
    %c15_i32_3 = arith.constant 15 : i32
    %12 = tpu.dynamic_rotate %4 by %c15_i32_3 dim 0 : vector<16x128xf32>, i32 -> vector<16x128xf32>
    %cst_4 = arith.constant 0.000000e+00 : f32
    %13 = vector.broadcast %cst_4 : f32 to vector<16x128xf32>
    %14 = arith.select %11, %13, %12 : vector<16x128xi1>, vector<16x128xf32>
    %15 = tpu.concatenate %9, %4, %14 in 1 : vector<16x128xf32>, vector<16x128xf32>, vector<16x128xf32> -> vector<16x384xf32>
    %16 = arith.truncf %15 : vector<16x384xf32> to vector<16x384xbf16>
    %c0_5 = arith.constant 0 : index
    %c0_6 = arith.constant 0 : index
    %17 = vector.load %arg2[%c0_5, %c0_6] : memref<384x128xbf16, #tpu.memory_space<vmem>>, vector<384x128xbf16>
    %cst_7 = arith.constant dense<0.000000e+00> : vector<16x128xf32>
    %18 = tpu.matmul %16, %17, %cst_7 {dimension_numbers = #tpu.dot_dimension_numbers<[1], [0], [0], [1], [0, 0, 1, 1], [], []>} : vector<16x384xbf16>, vector<384x128xbf16>, vector<16x128xf32> -> vector<16x128xf32>
    %c0_8 = arith.constant 0 : index
    %c0_9 = arith.constant 0 : index
    %19 = vector.load %arg3[%c0_8, %c0_9] : memref<1x128xf32, #tpu.memory_space<vmem>>, vector<1x128xf32>
    %20 = vector.broadcast %19 : vector<1x128xf32> to vector<16x128xf32>
    %21 = arith.addf %18, %20 : vector<16x128xf32>
    %cst_10 = arith.constant 0.000000e+00 : f32
    %22 = vector.broadcast %cst_10 : f32 to vector<16x128xf32>
    %23 = arith.maximumf %21, %22 : vector<16x128xf32>
    %c0_i32_11 = arith.constant 0 : i32
    %24 = vector.broadcast %c0_i32_11 : i32 to vector<16x128xi32>
    %25 = arith.cmpi eq, %2, %24 : vector<16x128xi32>
    %c1_i32_12 = arith.constant 1 : i32
    %26 = tpu.dynamic_rotate %23 by %c1_i32_12 dim 0 : vector<16x128xf32>, i32 -> vector<16x128xf32>
    %cst_13 = arith.constant 0.000000e+00 : f32
    %27 = vector.broadcast %cst_13 : f32 to vector<16x128xf32>
    %28 = arith.select %25, %27, %26 : vector<16x128xi1>, vector<16x128xf32>
    %c15_i32_14 = arith.constant 15 : i32
    %29 = vector.broadcast %c15_i32_14 : i32 to vector<16x128xi32>
    %30 = arith.cmpi eq, %2, %29 : vector<16x128xi32>
    %c15_i32_15 = arith.constant 15 : i32
    %31 = tpu.dynamic_rotate %23 by %c15_i32_15 dim 0 : vector<16x128xf32>, i32 -> vector<16x128xf32>
    %cst_16 = arith.constant 0.000000e+00 : f32
    %32 = vector.broadcast %cst_16 : f32 to vector<16x128xf32>
    %33 = arith.select %30, %32, %31 : vector<16x128xi1>, vector<16x128xf32>
    %34 = tpu.concatenate %28, %23, %33 in 1 : vector<16x128xf32>, vector<16x128xf32>, vector<16x128xf32> -> vector<16x384xf32>
    %35 = arith.truncf %34 : vector<16x384xf32> to vector<16x384xbf16>
    %c0_17 = arith.constant 0 : index
    %c0_18 = arith.constant 0 : index
    %36 = vector.load %arg4[%c0_17, %c0_18] : memref<384x128xbf16, #tpu.memory_space<vmem>>, vector<384x128xbf16>
    %cst_19 = arith.constant dense<0.000000e+00> : vector<16x128xf32>
    %37 = tpu.matmul %35, %36, %cst_19 {dimension_numbers = #tpu.dot_dimension_numbers<[1], [0], [0], [1], [0, 0, 1, 1], [], []>} : vector<16x384xbf16>, vector<384x128xbf16>, vector<16x128xf32> -> vector<16x128xf32>
    %38 = arith.addf %37, %1 : vector<16x128xf32>
    %39 = arith.truncf %38 : vector<16x128xf32> to vector<16x128xbf16>
    %c0_20 = arith.constant 0 : index
    %c0_21 = arith.constant 0 : index
    %40 = vector.load %arg5[%c0_20, %c0_21] : memref<128x128xbf16, #tpu.memory_space<vmem>>, vector<128x128xbf16>
    %cst_22 = arith.constant dense<0.000000e+00> : vector<16x128xf32>
    %41 = tpu.matmul %39, %40, %cst_22 {dimension_numbers = #tpu.dot_dimension_numbers<[1], [0], [0], [1], [0, 0, 1, 1], [], []>} : vector<16x128xbf16>, vector<128x128xbf16>, vector<16x128xf32> -> vector<16x128xf32>
    %c0_23 = arith.constant 0 : index
    %c0_24 = arith.constant 0 : index
    %42 = vector.load %arg6[%c0_23, %c0_24] : memref<1x128xf32, #tpu.memory_space<vmem>>, vector<1x128xf32>
    %43 = vector.broadcast %42 : vector<1x128xf32> to vector<16x128xf32>
    %44 = arith.addf %41, %43 : vector<16x128xf32>
    %c0_25 = arith.constant 0 : index
    %c0_26 = arith.constant 0 : index
    %c0_27 = arith.constant 0 : index
    %45 = vector.load %arg7[%c0_25, %c0_26, %c0_27] : memref<1x16x128xf32, #tpu.memory_space<vmem>>, vector<1x16x128xf32>
    %46 = vector.shape_cast %45 : vector<1x16x128xf32> to vector<16x128xf32>
    %47 = vector.shape_cast %44 : vector<16x128xf32> to vector<1x16x128xf32>
    tpu.vector_store %arg7[%c0_25, %c0_26, %c0_27], %47 {strides = array<i32>} : memref<1x16x128xf32, #tpu.memory_space<vmem>>, vector<1x16x128xf32>,
    return
  }
  func.func @transform_0(%arg0: i32) -> (i32, i32, i32) {
    %c0_i32 = arith.constant 0 : i32
    %c0_i32_0 = arith.constant 0 : i32
    %c0_i32_1 = arith.constant 0 : i32
    return %arg0, %c0_i32, %c0_i32_0 : i32, i32, i32
  }
  func.func @transform_1(%arg0: i32) -> (i32, i32) {
    %c0_i32 = arith.constant 0 : i32
    %c0_i32_0 = arith.constant 0 : i32
    %c0_i32_1 = arith.constant 0 : i32
    return %c0_i32, %c0_i32_0 : i32, i32
  }
  func.func @transform_2(%arg0: i32) -> (i32, i32) {
    %c0_i32 = arith.constant 0 : i32
    %c0_i32_0 = arith.constant 0 : i32
    %c0_i32_1 = arith.constant 0 : i32
    return %c0_i32, %c0_i32_0 : i32, i32
  }
  func.func @transform_3(%arg0: i32) -> (i32, i32) {
    %c0_i32 = arith.constant 0 : i32
    %c0_i32_0 = arith.constant 0 : i32
    %c0_i32_1 = arith.constant 0 : i32
    return %c0_i32, %c0_i32_0 : i32, i32
  }
  func.func @transform_4(%arg0: i32) -> (i32, i32) {
    %c0_i32 = arith.constant 0 : i32
    %c0_i32_0 = arith.constant 0 : i32
    %c0_i32_1 = arith.constant 0 : i32
    return %c0_i32, %c0_i32_0 : i32, i32
  }
  func.func @transform_5(%arg0: i32) -> (i32, i32) {
    %c0_i32 = arith.constant 0 : i32
    %c0_i32_0 = arith.constant 0 : i32
    %c0_i32_1 = arith.constant 0 : i32
    return %c0_i32, %c0_i32_0 : i32, i32
  }
  func.func @transform_6(%arg0: i32) -> (i32, i32, i32) {
    %c0_i32 = arith.constant 0 : i32
    %c0_i32_0 = arith.constant 0 : i32
    %c0_i32_1 = arith.constant 0 : i32
    return %arg0, %c0_i32, %c0_i32_0 : i32, i32, i32
  }
}

</mosaic_0001>

<llo_original>
// kernel: tpu_custom_call.1
$region0: #{tpu_custom_call.1}
  #allocation0 [shape = 'u32[]', space=smem, size = 0x4, offset = 0x4, fixed_abs, tag = 'smem constant byte address 0x4 - core index']
  #allocation1 [shape = 'u32[72,128]{1,0:T(1,128)}', space=vmem, size = 0x9000, scoped, tag = 'internal scratch']
  %s0 = inlined_call_operand.hbm [shape: f32[2,16,128], index: 0, kind: input, shape index: {}]
  %s1 = inlined_call_operand.hbm [shape: bf16[384,128], index: 1, kind: input, shape index: {}]
  %s2 = inlined_call_operand.vmem [shape: f32[1,128], index: 2, kind: input, shape index: {}]
  %s3 = inlined_call_operand.hbm [shape: bf16[384,128], index: 3, kind: input, shape index: {}]
  %s4 = inlined_call_operand.hbm [shape: bf16[128,128], index: 4, kind: input, shape index: {}]
  %s5 = inlined_call_operand.vmem [shape: f32[1,128], index: 5, kind: input, shape index: {}]
  %s6 = inlined_call_operand.hbm [shape: f32[2,16,128], index: 6, kind: output, shape index: {}]
  %s7 = sld [smem:[#allocation0]]
  $region73: #{tpu_custom_call.1} parent=0
    _
  %s9 = ssub.s32 1, %s7
  %s10 = scalar_select 0, %s9, %s7
  $region1: #{tpu_custom_call.1} parent=0
    #allocation2 [shape = 'u8[16384]{0}', space=vmem, size = 0x4000, scoped, tag = 'input window, operand 0']
    #allocation3 [shape = 's32[2]{0}', space=sflag, size = 0x8, scoped, tag = 'scoped memory for tpu_custom_call.1']
    #allocation4 [shape = 's32[2]{0}', space=sflag, size = 0x8, scoped, tag = 'scoped memory for tpu_custom_call.1']
    #allocation5 [shape = 'u8[98304]{0}', space=vmem, size = 0x18000, scoped, tag = 'input window, operand 1, single buffered']
    #allocation6 [shape = 's32[1]{0}', space=sflag, size = 0x4, scoped, tag = 'scoped memory for tpu_custom_call.1']
    #allocation7 [shape = 'u8[98304]{0}', space=vmem, size = 0x18000, scoped, tag = 'input window, operand 3, single buffered']
    #allocation8 [shape = 'u8[32768]{0}', space=vmem, size = 0x8000, scoped, tag = 'input window, operand 4, single buffered']
    #allocation9 [shape = 's32[1]{0}', space=sflag, size = 0x4, scoped, tag = 'scoped memory for tpu_custom_call.1']
    #allocation10 [shape = 'u8[16384]{0}', space=vmem, size = 0x4000, scoped, tag = 'output window, operand 0']
    %11 = vsyncpa [#allocation3], 0
    %s12 = scalar_lea.sflag [#allocation3], 1
    %13 = vsyncpa %s12, 0
    %14 = vsyncpa [#allocation6], 0
    %15 = vsyncpa [#allocation9], 0
    %16 = vsyncpa [#allocation4], 0
    %s17 = scalar_lea.sflag [#allocation4], 1
    %18 = vsyncpa %s17, 0
    loop: start=0, step=1, limit=4
    $region2: #{tpu_custom_call.1} parent=1 // loop_pre_header
      _
    $region3: #{tpu_custom_call.1} parent=1 // loop_header
      %s20 = sphi 0, %s24
      %p21 = scmp.ge.s32.totalorder %s20, 4
      %s30 = sphi 0, %s32
      %s33 = sphi 0, %s30
      %s34 = sphi 0, %s33
      %s50 = sphi 0, %s34
      %s54 = sphi 0, %s54
      %s56 = sphi 0, %s54
      %s57 = sphi 0, %s56
      %s71 = sphi 0, %s57
      %s75 = sphi 0, %s75
      %s77 = sphi 0, %s75
      %s78 = sphi 0, %s77
      %s92 = sphi 0, %s78
      %s96 = sphi 0, %s96
      %s98 = sphi 0, %s96
      %s99 = sphi 0, %s98
      %s113 = sphi 0, %s99
      %s117 = sphi 0, %s117
      %s119 = sphi 0, %s117
      %s120 = sphi 0, %s119
      %s134 = sphi 0, %s120
      %s138 = sphi 0, %s138
      %s140 = sphi 0, %s138
      %s141 = sphi 0, %s140
      %s155 = sphi 0, %s141
      %s161 = sphi 0, %s163
      %s164 = sphi 0, %s161
      %s165 = sphi 0, %s164
      %s181 = sphi 0, %s165
    $region4: #{tpu_custom_call.1} parent=1 // loop_header_branch
      %23 = sbr.rel (%p21) target = $region8
    $region5: #{tpu_custom_call.1} parent=1 // loop_body
      %s25 = ssub.s32 %s20, 1
      %s26 = ssub.s32 %s20, 2
      %s27 = sadd.s32 %s20, 1
      %s28 = ssub.s32 %s20, %s27
      %p29 = scmp.eq.s32.totalorder %s28, 0
      %s31 = sadd.s32 %s30, 1
      %s32 = scalar_select %p29, %s30, %s31
      %p35 = pneg %p29
      %p36 = scmp.eq.s32.totalorder %s20, 1
      %p37 = por %p35, %p36
      %p38 = scmp.ne.s32.totalorder %s30, %s33
      %p39 = scmp.eq.s32.totalorder %s20, 0
      %p40 = por %p38, %p39
      %p41 = scmp.ne.s32.totalorder %s30, %s33
      %p42 = scmp.eq.s32.totalorder %s25, 1
      %p43 = por %p41, %p42
      %p44 = scmp.ne.s32.totalorder %s33, %s34
      %p45 = scmp.eq.s32.totalorder %s25, 0
      %p46 = por %p44, %p45
      %p47 = scmp.ne.s32.totalorder %s33, %s34
      %p48 = scmp.eq.s32.totalorder %s26, 1
      %p49 = por %p47, %p48
      %p51 = scmp.ne.s32.totalorder %s34, %s50
      %p52 = scmp.eq.s32.totalorder %s26, 0
      %p53 = por %p51, %p52
      %s55 = sadd.s32 %s54, 1
      %p58 = scmp.eq.s32.totalorder %s20, 1
      %p59 = scmp.ne.s32.totalorder %s54, %s56
      %p60 = scmp.eq.s32.totalorder %s20, 0
      %p61 = por %p59, %p60
      %p62 = scmp.ne.s32.totalorder %s54, %s56
      %p63 = scmp.eq.s32.totalorder %s25, 1
      %p64 = por %p62, %p63
      %p65 = scmp.ne.s32.totalorder %s56, %s57
      %p66 = scmp.eq.s32.totalorder %s25, 0
      %p67 = por %p65, %p66
      %p68 = scmp.ne.s32.totalorder %s56, %s57
      %p69 = scmp.eq.s32.totalorder %s26, 1
      %p70 = por %p68, %p69
      %p72 = scmp.ne.s32.totalorder %s57, %s71
      %p73 = scmp.eq.s32.totalorder %s26, 0
      %p74 = por %p72, %p73
      %s76 = sadd.s32 %s75, 1
      %p79 = scmp.eq.s32.totalorder %s20, 1
      %p80 = scmp.ne.s32.totalorder %s75, %s77
      %p81 = scmp.eq.s32.totalorder %s20, 0
      %p82 = por %p80, %p81
      %p83 = scmp.ne.s32.totalorder %s75, %s77
      %p84 = scmp.eq.s32.totalorder %s25, 1
      %p85 = por %p83, %p84
      %p86 = scmp.ne.s32.totalorder %s77, %s78
      %p87 = scmp.eq.s32.totalorder %s25, 0
      %p88 = por %p86, %p87
      %p89 = scmp.ne.s32.totalorder %s77, %s78
      %p90 = scmp.eq.s32.totalorder %s26, 1
      %p91 = por %p89, %p90
      %p93 = scmp.ne.s32.totalorder %s78, %s92
      %p94 = scmp.eq.s32.totalorder %s26, 0
      %p95 = por %p93, %p94
      %s97 = sadd.s32 %s96, 1
      %p100 = scmp.eq.s32.totalorder %s20, 1
      %p101 = scmp.ne.s32.totalorder %s96, %s98
      %p102 = scmp.eq.s32.totalorder %s20, 0
      %p103 = por %p101, %p102
      %p104 = scmp.ne.s32.totalorder %s96, %s98
      %p105 = scmp.eq.s32.totalorder %s25, 1
      %p106 = por %p104, %p105
      %p107 = scmp.ne.s32.totalorder %s98, %s99
      %p108 = scmp.eq.s32.totalorder %s25, 0
      %p109 = por %p107, %p108
      %p110 = scmp.ne.s32.totalorder %s98, %s99
      %p111 = scmp.eq.s32.totalorder %s26, 1
      %p112 = por %p110, %p111
      %p114 = scmp.ne.s32.totalorder %s99, %s113
      %p115 = scmp.eq.s32.totalorder %s26, 0
      %p116 = por %p114, %p115
      %s118 = sadd.s32 %s117, 1
      %p121 = scmp.eq.s32.totalorder %s20, 1
      %p122 = scmp.ne.s32.totalorder %s117, %s119
      %p123 = scmp.eq.s32.totalorder %s20, 0
      %p124 = por %p122, %p123
      %p125 = scmp.ne.s32.totalorder %s117, %s119
      %p126 = scmp.eq.s32.totalorder %s25, 1
      %p127 = por %p125, %p126
      %p128 = scmp.ne.s32.totalorder %s119, %s120
      %p129 = scmp.eq.s32.totalorder %s25, 0
      %p130 = por %p128, %p129
      %p131 = scmp.ne.s32.totalorder %s119, %s120
      %p132 = scmp.eq.s32.totalorder %s26, 1
      %p133 = por %p131, %p132
      %p135 = scmp.ne.s32.totalorder %s120, %s134
      %p136 = scmp.eq.s32.totalorder %s26, 0
      %p137 = por %p135, %p136
      %s139 = sadd.s32 %s138, 1
      %p142 = scmp.eq.s32.totalorder %s20, 1
      %p143 = scmp.ne.s32.totalorder %s138, %s140
      %p144 = scmp.eq.s32.totalorder %s20, 0
      %p145 = por %p143, %p144
      %p146 = scmp.ne.s32.totalorder %s138, %s140
      %p147 = scmp.eq.s32.totalorder %s25, 1
      %p148 = por %p146, %p147
      %p149 = scmp.ne.s32.totalorder %s140, %s141
      %p150 = scmp.eq.s32.totalorder %s25, 0
      %p151 = por %p149, %p150
      %p152 = scmp.ne.s32.totalorder %s140, %s141
      %p153 = scmp.eq.s32.totalorder %s26, 1
      %p154 = por %p152, %p153
      %p156 = scmp.ne.s32.totalorder %s141, %s155
      %p157 = scmp.eq.s32.totalorder %s26, 0
      %p158 = por %p156, %p157
      %s159 = ssub.s32 %s20, %s27
      %p160 = scmp.eq.s32.totalorder %s159, 0
      %s162 = sadd.s32 %s161, 1
      %s163 = scalar_select %p160, %s161, %s162
      %p166 = pneg %p160
      %p167 = scmp.eq.s32.totalorder %s20, 1
      %p168 = por %p166, %p167
      %p169 = scmp.ne.s32.totalorder %s161, %s164
      %p170 = scmp.eq.s32.totalorder %s20, 0
      %p171 = por %p169, %p170
      %p172 = scmp.ne.s32.totalorder %s161, %s164
      %p173 = scmp.eq.s32.totalorder %s25, 1
      %p174 = por %p172, %p173
      %p175 = scmp.ne.s32.totalorder %s164, %s165
      %p176 = scmp.eq.s32.totalorder %s25, 0
      %p177 = por %p175, %p176
      %p178 = scmp.ne.s32.totalorder %s164, %s165
      %p179 = scmp.eq.s32.totalorder %s26, 1
      %p180 = por %p178, %p179
      %p182 = scmp.ne.s32.totalorder %s165, %s181
      %p183 = scmp.eq.s32.totalorder %s26, 0
      %p184 = por %p182, %p183
      %p185 = scmp.le.s32.totalorder 1, %s20
      %p186 = scmp.lt.s32.totalorder %s20, 3
      %p187 = pnand %p185, %p186
      %p188 = pneg %p187
      // Predicated region
      $region9: #{tpu_custom_call.1} parent=5 // pred_check
        _
      $region10: #{tpu_custom_call.1} parent=5 // pred_check_branch
        %190 = sbr.rel (%p187) target = $region12
      $region11: #{tpu_custom_call.1} parent=5 // pred_region
        %s191 = ssub.s32 %s20, 1
        // Predicated region
        $region13: #{tpu_custom_call.1} parent=11 // pred_check
          %p192 = pneg %p67
        $region14: #{tpu_custom_call.1} parent=11 // pred_check_branch
          %194 = sbr.rel (%p192) target = $region16
        $region15: #{tpu_custom_call.1} parent=11 // pred_region
          %196 = vsyncadd [#allocation6], 0
          %s197 = sshll.u32 %s1, 4
          %s198 = int_to_ptr.hbm [resolvable:$true] %s197
          %s199 = sshll.u32 [#allocation5], 4
          %s200 = int_to_ptr.vmem [resolvable:$true] %s199
          %205 = dma.hbm_to_vmem [thread:$0]  %s198, 3072, %s200, [#allocation6], 64, 64, 4
        $region16: #{tpu_custom_call.1} parent=11 // pred_fallthru
          _
        // Predicated region
        $region17: #{tpu_custom_call.1} parent=11 // pred_check
          %p206 = pneg %p88
        $region18: #{tpu_custom_call.1} parent=11 // pred_check_branch
          %208 = sbr.rel (%p206) target = $region20
        $region19: #{tpu_custom_call.1} parent=11 // pred_region
          _
        $region20: #{tpu_custom_call.1} parent=11 // pred_fallthru
          _
        // Predicated region
        $region21: #{tpu_custom_call.1} parent=11 // pred_check
          %p209 = pneg %p109
        $region22: #{tpu_custom_call.1} parent=11 // pred_check_branch
          %211 = sbr.rel (%p209) target = $region24
        $region23: #{tpu_custom_call.1} parent=11 // pred_region
          %213 = vsyncadd [#allocation6], 0
          %s214 = sshll.u32 %s3, 4
          %s215 = int_to_ptr.hbm [resolvable:$true] %s214
          %s216 = sshll.u32 [#allocation7], 4
          %s217 = int_to_ptr.vmem [resolvable:$true] %s216
          %222 = dma.hbm_to_vmem [thread:$0]  %s215, 3072, %s217, [#allocation6], 64, 64, 4
        $region24: #{tpu_custom_call.1} parent=11 // pred_fallthru
          _
        // Predicated region
        $region25: #{tpu_custom_call.1} parent=11 // pred_check
          %p223 = pneg %p130
        $region26: #{tpu_custom_call.1} parent=11 // pred_check_branch
          %225 = sbr.rel (%p223) target = $region28
        $region27: #{tpu_custom_call.1} parent=11 // pred_region
          %227 = vsyncadd [#allocation9], 0
          %s228 = sshll.u32 %s4, 4
          %s229 = int_to_ptr.hbm [resolvable:$true] %s228
          %s230 = sshll.u32 [#allocation8], 4
          %s231 = int_to_ptr.vmem [resolvable:$true] %s230
          %236 = dma.hbm_to_vmem [thread:$0]  %s229, 1024, %s231, [#allocation9], 64, 64, 4
        $region28: #{tpu_custom_call.1} parent=11 // pred_fallthru
          _
        // Predicated region
        $region29: #{tpu_custom_call.1} parent=11 // pred_check
          %p237 = pneg %p151
        $region30: #{tpu_custom_call.1} parent=11 // pred_check_branch
          %239 = sbr.rel (%p237) target = $region32
        $region31: #{tpu_custom_call.1} parent=11 // pred_region
          _
        $region32: #{tpu_custom_call.1} parent=11 // pred_fallthru
          _
      $region12: #{tpu_custom_call.1} parent=5 // pred_fallthru
        _
      %p240 = scmp.lt.s32.totalorder %s20, 2
      // Predicated region
      $region33: #{tpu_custom_call.1} parent=5 // pred_check
        %p241 = pneg %p240
      $region34: #{tpu_custom_call.1} parent=5 // pred_check_branch
        %243 = sbr.rel (%p241) target = $region36
      $region35: #{tpu_custom_call.1} parent=5 // pred_region
        // Predicated region
        $region37: #{tpu_custom_call.1} parent=35 // pred_check
          %p244 = pneg %p40
        $region38: #{tpu_custom_call.1} parent=35 // pred_check_branch
          %246 = sbr.rel (%p244) target = $region40
        $region39: #{tpu_custom_call.1} parent=35 // pred_region
          %s247 = sand.u32 %s30, 1
          %s248 = scalar_lea.sflag [#allocation3], %s247
          %s249 = sand.u32 %s30, 1
          %s250 = smul.addr %s249, 16
          %s251 = scalar_lea.vmem [#allocation2], %s250
          %253 = vsyncadd %s248, 0
          %s254 = smul.addr %s20, 2
          %s255 = smul.addr %s254, 8
          %s256 = scalar_lea.hbm %s0, %s255
          %s257 = sshll.u32 %s256, 4
          %s258 = int_to_ptr.hbm [resolvable:$true] %s257
          %s259 = sshll.u32 %s251, 4
          %s260 = int_to_ptr.vmem [resolvable:$true] %s259
          %265 = dma.hbm_to_vmem [thread:$0]  %s258, 256, %s260, %s248, 128, 128, 8
        $region40: #{tpu_custom_call.1} parent=35 // pred_fallthru
          _
      $region36: #{tpu_custom_call.1} parent=5 // pred_fallthru
        _
      %p266 = scmp.le.s32.totalorder 1, %s20
      %p267 = scmp.lt.s32.totalorder %s20, 3
      %p268 = pnand %p266, %p267
      %p269 = pneg %p268
      // Predicated region
      $region41: #{tpu_custom_call.1} parent=5 // pred_check
        _
      $region42: #{tpu_custom_call.1} parent=5 // pred_check_branch
        %271 = sbr.rel (%p268) target = $region44
      $region43: #{tpu_custom_call.1} parent=5 // pred_region
        %s272 = ssub.s32 %s20, 1
        %s273 = sand.u32 %s33, 1
        %s274 = scalar_lea.sflag [#allocation3], %s273
        %s275 = sand.u32 %s33, 1
        %s276 = smul.addr %s275, 16
        %s277 = scalar_lea.vmem [#allocation2], %s276
        // Predicated region
        $region45: #{tpu_custom_call.1} parent=43 // pred_check
          %p278 = pneg %p46
        $region46: #{tpu_custom_call.1} parent=43 // pred_check_branch
          %280 = sbr.rel (%p278) target = $region48
        $region47: #{tpu_custom_call.1} parent=43 // pred_region
          %282 = dma.done %s274, 256
        $region48: #{tpu_custom_call.1} parent=43 // pred_fallthru
          _
        // Predicated region
        $region49: #{tpu_custom_call.1} parent=43 // pred_check
          %p283 = pneg %p67
        $region50: #{tpu_custom_call.1} parent=43 // pred_check_branch
          %285 = sbr.rel (%p283) target = $region52
        $region51: #{tpu_custom_call.1} parent=43 // pred_region
          %287 = dma.done [#allocation6], 3072
        $region52: #{tpu_custom_call.1} parent=43 // pred_fallthru
          _
        // Predicated region
        $region53: #{tpu_custom_call.1} parent=43 // pred_check
          %p288 = pneg %p109
        $region54: #{tpu_custom_call.1} parent=43 // pred_check_branch
          %290 = sbr.rel (%p288) target = $region56
        $region55: #{tpu_custom_call.1} parent=43 // pred_region
          %292 = dma.done [#allocation6], 3072
        $region56: #{tpu_custom_call.1} parent=43 // pred_fallthru
          _
        // Predicated region
        $region57: #{tpu_custom_call.1} parent=43 // pred_check
          %p293 = pneg %p130
        $region58: #{tpu_custom_call.1} parent=43 // pred_check_branch
          %295 = sbr.rel (%p293) target = $region60
        $region59: #{tpu_custom_call.1} parent=43 // pred_region
          %297 = dma.done [#allocation9], 1024
        $region60: #{tpu_custom_call.1} parent=43 // pred_fallthru
          _
        %s298 = sand.u32 %s33, 1
        %s299 = scalar_lea.sflag [#allocation3], %s298
        %s300 = sand.u32 %s33, 1
        %s301 = smul.addr %s300, 16
        %s302 = scalar_lea.vmem [#allocation2], %s301
        %p303 = pneg %p46
        %p304 = pneg %p43
        %p305 = pneg %p67
        %p306 = pneg %p64
        %p307 = pneg %p88
        %p308 = pneg %p85
        %p309 = pneg %p109
        %p310 = pneg %p106
        %p311 = pneg %p130
        %p312 = pneg %p127
        %p313 = pneg %p151
        %p314 = pneg %p148
        %p315 = pneg %p177
        %p316 = pneg %p174
        %s317 = sand.u32 %s164, 1
        %s318 = scalar_lea.sflag [#allocation4], %s317
        %s319 = sand.u32 %s164, 1
        %s320 = smul.addr %s319, 16
        %s321 = scalar_lea.vmem [#allocation10], %s320
        %v322 = vld [vmem:[%s277] sm:$0xff]
        %v323 = vld [vmem:[%s277 + $0x8] sm:$0xff]
        %v324 = vlaneseq
        %v325 = vshrl.u32 %v324, 7
        %v326 = vadd.s32 %v325, 8
        %v327 = vmax.f32 %v322, 0.0
        %v328 = vmax.f32 %v323, 0.0
        %vm329 = vcmp.eq.s32.totalorder %v325, 0
        %vm330 = vcmp.eq.s32.totalorder %v326, 0
        %v331 = vrot.slane %v327, 7
        %v332 = vrot.slane %v328, 7
        %vm333 = vcmp.lt.s32.totalorder %v325, 1
        %v334 = vsel %vm333, %v331, %v332
        %v335 = vsel %vm333, %v332, %v331
        %v336 = vsel %vm329, 0.0, %v335
        %v337 = vsel %vm330, 0.0, %v334
        %vm338 = vcmp.eq.s32.totalorder %v325, 15
        %vm339 = vcmp.eq.s32.totalorder %v326, 15
        %v340 = vrot.slane %v327, 1
        %v341 = vrot.slane %v328, 1
        %vm342 = vcmp.lt.s32.totalorder %v325, 7
        %v343 = vsel %vm342, %v340, %v341
        %v344 = vsel %vm342, %v341, %v340
        %v345 = vsel %vm338, 0.0, %v343
        %v346 = vsel %vm339, 0.0, %v344
        %v347 = vpack.c.bf16 %v337, %v336
        %v348 = vpack.c.bf16 %v328, %v327
        %v349 = vpack.c.bf16 %v346, %v345
        %v350 = vld [vmem:[#allocation5] sm:$0xf]
        %v351 = vld [vmem:[#allocation5 + $0x4] sm:$0xf]
        %v352 = vld [vmem:[#allocation5 + $0x8] sm:$0xf]
        %v353 = vld [vmem:[#allocation5 + $0xc] sm:$0xf]
        %v354 = vld [vmem:[#allocation5 + $0x10] sm:$0xf]
        %v355 = vld [vmem:[#allocation5 + $0x14] sm:$0xf]
        %v356 = vld [vmem:[#allocation5 + $0x18] sm:$0xf]
        %v357 = vld [vmem:[#allocation5 + $0x1c] sm:$0xf]
        %v358 = vld [vmem:[#allocation5 + $0x20] sm:$0xf]
        %v359 = vld [vmem:[#allocation5 + $0x24] sm:$0xf]
        %v360 = vld [vmem:[#allocation5 + $0x28] sm:$0xf]
        %v361 = vld [vmem:[#allocation5 + $0x2c] sm:$0xf]
        %v362 = vld [vmem:[#allocation5 + $0x30] sm:$0xf]
        %v363 = vld [vmem:[#allocation5 + $0x34] sm:$0xf]
        %v364 = vld [vmem:[#allocation5 + $0x38] sm:$0xf]
        %v365 = vld [vmem:[#allocation5 + $0x3c] sm:$0xf]
        %v366 = vld [vmem:[#allocation5 + $0x40] sm:$0xf]
        %v367 = vld [vmem:[#allocation5 + $0x44] sm:$0xf]
        %v368 = vld [vmem:[#allocation5 + $0x48] sm:$0xf]
        %v369 = vld [vmem:[#allocation5 + $0x4c] sm:$0xf]
        %v370 = vld [vmem:[#allocation5 + $0x50] sm:$0xf]
        %v371 = vld [vmem:[#allocation5 + $0x54] sm:$0xf]
        %v372 = vld [vmem:[#allocation5 + $0x58] sm:$0xf]
        %v373 = vld [vmem:[#allocation5 + $0x5c] sm:$0xf]
        %v374 = vld [vmem:[#allocation5 + $0x60] sm:$0xf]
        %v375 = vld [vmem:[#allocation5 + $0x64] sm:$0xf]
        %v376 = vld [vmem:[#allocation5 + $0x68] sm:$0xf]
        %v377 = vld [vmem:[#allocation5 + $0x6c] sm:$0xf]
        %v378 = vld [vmem:[#allocation5 + $0x70] sm:$0xf]
        %v379 = vld [vmem:[#allocation5 + $0x74] sm:$0xf]
        %v380 = vld [vmem:[#allocation5 + $0x78] sm:$0xf]
        %v381 = vld [vmem:[#allocation5 + $0x7c] sm:$0xf]
        %v382 = vld [vmem:[#allocation5 + $0x80] sm:$0xf]
        %v383 = vld [vmem:[#allocation5 + $0x84] sm:$0xf]
        %v384 = vld [vmem:[#allocation5 + $0x88] sm:$0xf]
        %v385 = vld [vmem:[#allocation5 + $0x8c] sm:$0xf]
        %v386 = vld [vmem:[#allocation5 + $0x90] sm:$0xf]
        %v387 = vld [vmem:[#allocation5 + $0x94] sm:$0xf]
        %v388 = vld [vmem:[#allocation5 + $0x98] sm:$0xf]
        %v389 = vld [vmem:[#allocation5 + $0x9c] sm:$0xf]
        %v390 = vld [vmem:[#allocation5 + $0xa0] sm:$0xf]
        %v391 = vld [vmem:[#allocation5 + $0xa4] sm:$0xf]
        %v392 = vld [vmem:[#allocation5 + $0xa8] sm:$0xf]
        %v393 = vld [vmem:[#allocation5 + $0xac] sm:$0xf]
        %v394 = vld [vmem:[#allocation5 + $0xb0] sm:$0xf]
        %v395 = vld [vmem:[#allocation5 + $0xb4] sm:$0xf]
        %v396 = vld [vmem:[#allocation5 + $0xb8] sm:$0xf]
        %v397 = vld [vmem:[#allocation5 + $0xbc] sm:$0xf]
        %v398 = vld [vmem:[%s2] sm:$0x1]
        %v400 = vperm.slane %v398, 0
        %v450 = vunpack.c.l.b16 %v350
        %v451 = vunpack.c.l.b16 %v351
        %v452 = vunpack.c.l.b16 %v352
        %v453 = vunpack.c.l.b16 %v353
        %v454 = vunpack.c.l.b16 %v354
        %v455 = vunpack.c.l.b16 %v355
        %v456 = vunpack.c.l.b16 %v356
        %v457 = vunpack.c.l.b16 %v357
        %v458 = vunpack.c.l.b16 %v358
        %v459 = vunpack.c.l.b16 %v359
        %v460 = vunpack.c.l.b16 %v360
        %v461 = vunpack.c.l.b16 %v361
        %v462 = vunpack.c.l.b16 %v362
        %v463 = vunpack.c.l.b16 %v363
        %v464 = vunpack.c.l.b16 %v364
        %v465 = vunpack.c.l.b16 %v365
        %v466 = vunpack.c.l.b16 %v366
        %v467 = vunpack.c.l.b16 %v367
        %v468 = vunpack.c.l.b16 %v368
        %v469 = vunpack.c.l.b16 %v369
        %v470 = vunpack.c.l.b16 %v370
        %v471 = vunpack.c.l.b16 %v371
        %v472 = vunpack.c.l.b16 %v372
        %v473 = vunpack.c.l.b16 %v373
        %v474 = vunpack.c.l.b16 %v374
        %v475 = vunpack.c.l.b16 %v375
        %v476 = vunpack.c.l.b16 %v376
        %v477 = vunpack.c.l.b16 %v377
        %v478 = vunpack.c.l.b16 %v378
        %v479 = vunpack.c.l.b16 %v379
        %v480 = vunpack.c.l.b16 %v380
        %v481 = vunpack.c.l.b16 %v381
        %v482 = vunpack.c.l.b16 %v382
        %v483 = vunpack.c.l.b16 %v383
        %v484 = vunpack.c.l.b16 %v384
        %v485 = vunpack.c.l.b16 %v385
        %v486 = vunpack.c.l.b16 %v386
        %v487 = vunpack.c.l.b16 %v387
        %v488 = vunpack.c.l.b16 %v388
        %v489 = vunpack.c.l.b16 %v389
        %v490 = vunpack.c.l.b16 %v390
        %v491 = vunpack.c.l.b16 %v391
        %v492 = vunpack.c.l.b16 %v392
        %v493 = vunpack.c.l.b16 %v393
        %v494 = vunpack.c.l.b16 %v394
        %v495 = vunpack.c.l.b16 %v395
        %v496 = vunpack.c.l.b16 %v396
        %v497 = vunpack.c.l.b16 %v397
        %v498 = vpack.c.b16 %v451, %v450
        %v499 = vpack.c.b16 %v453, %v452
        %v500 = vpack.c.b16 %v455, %v454
        %v501 = vpack.c.b16 %v457, %v456
        %v502 = vpack.c.b16 %v459, %v458
        %v503 = vpack.c.b16 %v461, %v460
        %v504 = vpack.c.b16 %v463, %v462
        %v505 = vpack.c.b16 %v465, %v464
        %v506 = vpack.c.b16 %v467, %v466
        %v507 = vpack.c.b16 %v469, %v468
        %v508 = vpack.c.b16 %v471, %v470
        %v509 = vpack.c.b16 %v473, %v472
        %v510 = vpack.c.b16 %v475, %v474
        %v511 = vpack.c.b16 %v477, %v476
        %v512 = vpack.c.b16 %v479, %v478
        %v513 = vpack.c.b16 %v481, %v480
        %v514 = vpack.c.b16 %v483, %v482
        %v515 = vpack.c.b16 %v485, %v484
        %v516 = vpack.c.b16 %v487, %v486
        %v517 = vpack.c.b16 %v489, %v488
        %v518 = vpack.c.b16 %v491, %v490
        %v519 = vpack.c.b16 %v493, %v492
        %v520 = vpack.c.b16 %v495, %v494
        %v521 = vpack.c.b16 %v497, %v496
        %546 = vmatpush.bf16.msra.mxu0 %v505
        %547 = vmatpush.bf16.msra.mxu0 %v504
        %548 = vmatpush.bf16.msra.mxu0 %v503
        %549 = vmatpush.bf16.msra.mxu0 %v502
        %550 = vmatpush.bf16.msra.mxu0 %v501
        %551 = vmatpush.bf16.msra.mxu0 %v500
        %552 = vmatpush.bf16.msra.mxu0 %v499
        %553 = vmatpush.bf16.msra.mxu0 %v498
        %554 = vmatmul.bf16.gmra.mxu0 %v347
        %v555 = vpop.f32.mrf.mxu0
        %v556 = vadd.f32 %v400, %v555
        %v557 = vpop.f32.mrf.mxu0
        %v558 = vadd.f32 %v400, %v557
        %559 = vdwg.mxu0
        %560 = vmatpush.bf16.msra.mxu0 %v513
        %561 = vmatpush.bf16.msra.mxu0 %v512
        %562 = vmatpush.bf16.msra.mxu0 %v511
        %563 = vmatpush.bf16.msra.mxu0 %v510
        %564 = vmatpush.bf16.msra.mxu0 %v509
        %565 = vmatpush.bf16.msra.mxu0 %v508
        %566 = vmatpush.bf16.msra.mxu0 %v507
        %567 = vmatpush.bf16.msra.mxu0 %v506
        %568 = vmatmul.bf16.gmra.mxu0 %v348
        %v569 = vpop.f32.mrf.mxu0
        %v570 = vadd.f32 %v556, %v569
        %v571 = vpop.f32.mrf.mxu0
        %v572 = vadd.f32 %v558, %v571
        %573 = vdwg.mxu0
        %574 = vmatpush.bf16.msra.mxu0 %v521
        %575 = vmatpush.bf16.msra.mxu0 %v520
        %576 = vmatpush.bf16.msra.mxu0 %v519
        %577 = vmatpush.bf16.msra.mxu0 %v518
        %578 = vmatpush.bf16.msra.mxu0 %v517
        %579 = vmatpush.bf16.msra.mxu0 %v516
        %580 = vmatpush.bf16.msra.mxu0 %v515
        %581 = vmatpush.bf16.msra.mxu0 %v514
        %582 = vmatmul.bf16.gmra.mxu0 %v349
        %v583 = vpop.f32.mrf.mxu0
        %v584 = vadd.f32 %v570, %v583
        %v585 = vpop.f32.mrf.mxu0
        %v586 = vadd.f32 %v572, %v585
        %587 = vdwg.mxu0
        %v588 = vmax.f32 %v584, 0.0
        %v589 = vmax.f32 %v586, 0.0
        %v590 = vrot.slane %v588, 7
        %v591 = vrot.slane %v589, 7
        %v592 = vsel %vm333, %v590, %v591
        %v593 = vsel %vm333, %v591, %v590
        %v594 = vsel %vm329, 0.0, %v593
        %v595 = vsel %vm330, 0.0, %v592
        %v596 = vrot.slane %v588, 1
        %v597 = vrot.slane %v589, 1
        %v598 = vsel %vm342, %v596, %v597
        %v599 = vsel %vm342, %v597, %v596
        %v600 = vsel %vm338, 0.0, %v598
        %v601 = vsel %vm339, 0.0, %v599
        %v602 = vpack.c.bf16 %v595, %v594
        %v603 = vpack.c.bf16 %v589, %v588
        %v604 = vpack.c.bf16 %v601, %v600
        %v605 = vld [vmem:[#allocation7] sm:$0xf]
        %v606 = vld [vmem:[#allocation7 + $0x4] sm:$0xf]
        %v607 = vld [vmem:[#allocation7 + $0x8] sm:$0xf]
        %v608 = vld [vmem:[#allocation7 + $0xc] sm:$0xf]
        %v609 = vld [vmem:[#allocation7 + $0x10] sm:$0xf]
        %v610 = vld [vmem:[#allocation7 + $0x14] sm:$0xf]
        %v611 = vld [vmem:[#allocation7 + $0x18] sm:$0xf]
        %v612 = vld [vmem:[#allocation7 + $0x1c] sm:$0xf]
        %v613 = vld [vmem:[#allocation7 + $0x20] sm:$0xf]
        %v614 = vld [vmem:[#allocation7 + $0x24] sm:$0xf]
        %v615 = vld [vmem:[#allocation7 + $0x28] sm:$0xf]
        %v616 = vld [vmem:[#allocation7 + $0x2c] sm:$0xf]
        %v617 = vld [vmem:[#allocation7 + $0x30] sm:$0xf]
        %v618 = vld [vmem:[#allocation7 + $0x34] sm:$0xf]
        %v619 = vld [vmem:[#allocation7 + $0x38] sm:$0xf]
        %v620 = vld [vmem:[#allocation7 + $0x3c] sm:$0xf]
        %v621 = vld [vmem:[#allocation7 + $0x40] sm:$0xf]
        %v622 = vld [vmem:[#allocation7 + $0x44] sm:$0xf]
        %v623 = vld [vmem:[#allocation7 + $0x48] sm:$0xf]
        %v624 = vld [vmem:[#allocation7 + $0x4c] sm:$0xf]
        %v625 = vld [vmem:[#allocation7 + $0x50] sm:$0xf]
        %v626 = vld [vmem:[#allocation7 + $0x54] sm:$0xf]
        %v627 = vld [vmem:[#allocation7 + $0x58] sm:$0xf]
        %v628 = vld [vmem:[#allocation7 + $0x5c] sm:$0xf]
        %v629 = vld [vmem:[#allocation7 + $0x60] sm:$0xf]
        %v630 = vld [vmem:[#allocation7 + $0x64] sm:$0xf]
        %v631 = vld [vmem:[#allocation7 + $0x68] sm:$0xf]
        %v632 = vld [vmem:[#allocation7 + $0x6c] sm:$0xf]
        %v633 = vld [vmem:[#allocation7 + $0x70] sm:$0xf]
        %v634 = vld [vmem:[#allocation7 + $0x74] sm:$0xf]
        %v635 = vld [vmem:[#allocation7 + $0x78] sm:$0xf]
        %v636 = vld [vmem:[#allocation7 + $0x7c] sm:$0xf]
        %v637 = vld [vmem:[#allocation7 + $0x80] sm:$0xf]
        %v638 = vld [vmem:[#allocation7 + $0x84] sm:$0xf]
        %v639 = vld [vmem:[#allocation7 + $0x88] sm:$0xf]
        %v640 = vld [vmem:[#allocation7 + $0x8c] sm:$0xf]
        %v641 = vld [vmem:[#allocation7 + $0x90] sm:$0xf]
        %v642 = vld [vmem:[#allocation7 + $0x94] sm:$0xf]
        %v643 = vld [vmem:[#allocation7 + $0x98] sm:$0xf]
        %v644 = vld [vmem:[#allocation7 + $0x9c] sm:$0xf]
        %v645 = vld [vmem:[#allocation7 + $0xa0] sm:$0xf]
        %v646 = vld [vmem:[#allocation7 + $0xa4] sm:$0xf]
        %v647 = vld [vmem:[#allocation7 + $0xa8] sm:$0xf]
        %v648 = vld [vmem:[#allocation7 + $0xac] sm:$0xf]
        %v649 = vld [vmem:[#allocation7 + $0xb0] sm:$0xf]
        %v650 = vld [vmem:[#allocation7 + $0xb4] sm:$0xf]
        %v651 = vld [vmem:[#allocation7 + $0xb8] sm:$0xf]
        %v652 = vld [vmem:[#allocation7 + $0xbc] sm:$0xf]
        %v701 = vunpack.c.l.b16 %v605
        %v702 = vunpack.c.l.b16 %v606
        %v703 = vunpack.c.l.b16 %v607
        %v704 = vunpack.c.l.b16 %v608
        %v705 = vunpack.c.l.b16 %v609
        %v706 = vunpack.c.l.b16 %v610
        %v707 = vunpack.c.l.b16 %v611
        %v708 = vunpack.c.l.b16 %v612
        %v709 = vunpack.c.l.b16 %v613
        %v710 = vunpack.c.l.b16 %v614
        %v711 = vunpack.c.l.b16 %v615
        %v712 = vunpack.c.l.b16 %v616
        %v713 = vunpack.c.l.b16 %v617
        %v714 = vunpack.c.l.b16 %v618
        %v715 = vunpack.c.l.b16 %v619
        %v716 = vunpack.c.l.b16 %v620
        %v717 = vunpack.c.l.b16 %v621
        %v718 = vunpack.c.l.b16 %v622
        %v719 = vunpack.c.l.b16 %v623
        %v720 = vunpack.c.l.b16 %v624
        %v721 = vunpack.c.l.b16 %v625
        %v722 = vunpack.c.l.b16 %v626
        %v723 = vunpack.c.l.b16 %v627
        %v724 = vunpack.c.l.b16 %v628
        %v725 = vunpack.c.l.b16 %v629
        %v726 = vunpack.c.l.b16 %v630
        %v727 = vunpack.c.l.b16 %v631
        %v728 = vunpack.c.l.b16 %v632
        %v729 = vunpack.c.l.b16 %v633
        %v730 = vunpack.c.l.b16 %v634
        %v731 = vunpack.c.l.b16 %v635
        %v732 = vunpack.c.l.b16 %v636
        %v733 = vunpack.c.l.b16 %v637
        %v734 = vunpack.c.l.b16 %v638
        %v735 = vunpack.c.l.b16 %v639
        %v736 = vunpack.c.l.b16 %v640
        %v737 = vunpack.c.l.b16 %v641
        %v738 = vunpack.c.l.b16 %v642
        %v739 = vunpack.c.l.b16 %v643
        %v740 = vunpack.c.l.b16 %v644
        %v741 = vunpack.c.l.b16 %v645
        %v742 = vunpack.c.l.b16 %v646
        %v743 = vunpack.c.l.b16 %v647
        %v744 = vunpack.c.l.b16 %v648
        %v745 = vunpack.c.l.b16 %v649
        %v746 = vunpack.c.l.b16 %v650
        %v747 = vunpack.c.l.b16 %v651
        %v748 = vunpack.c.l.b16 %v652
        %v749 = vpack.c.b16 %v702, %v701
        %v750 = vpack.c.b16 %v704, %v703
        %v751 = vpack.c.b16 %v706, %v705
        %v752 = vpack.c.b16 %v708, %v707
        %v753 = vpack.c.b16 %v710, %v709
        %v754 = vpack.c.b16 %v712, %v711
        %v755 = vpack.c.b16 %v714, %v713
        %v756 = vpack.c.b16 %v716, %v715
        %v757 = vpack.c.b16 %v718, %v717
        %v758 = vpack.c.b16 %v720, %v719
        %v759 = vpack.c.b16 %v722, %v721
        %v760 = vpack.c.b16 %v724, %v723
        %v761 = vpack.c.b16 %v726, %v725
        %v762 = vpack.c.b16 %v728, %v727
        %v763 = vpack.c.b16 %v730, %v729
        %v764 = vpack.c.b16 %v732, %v731
        %v765 = vpack.c.b16 %v734, %v733
        %v766 = vpack.c.b16 %v736, %v735
        %v767 = vpack.c.b16 %v738, %v737
        %v768 = vpack.c.b16 %v740, %v739
        %v769 = vpack.c.b16 %v742, %v741
        %v770 = vpack.c.b16 %v744, %v743
        %v771 = vpack.c.b16 %v746, %v745
        %v772 = vpack.c.b16 %v748, %v747
        %797 = vmatpush.bf16.msra.mxu0 %v756
        %798 = vmatpush.bf16.msra.mxu0 %v755
        %799 = vmatpush.bf16.msra.mxu0 %v754
        %800 = vmatpush.bf16.msra.mxu0 %v753
        %801 = vmatpush.bf16.msra.mxu0 %v752
        %802 = vmatpush.bf16.msra.mxu0 %v751
        %803 = vmatpush.bf16.msra.mxu0 %v750
        %804 = vmatpush.bf16.msra.mxu0 %v749
        %805 = vmatmul.bf16.gmra.mxu0 %v602
        %v806 = vpop.f32.mrf.mxu0
        %v807 = vadd.f32 %v322, %v806
        %v808 = vpop.f32.mrf.mxu0
        %v809 = vadd.f32 %v323, %v808
        %810 = vdwg.mxu0
        %811 = vmatpush.bf16.msra.mxu0 %v764
        %812 = vmatpush.bf16.msra.mxu0 %v763
        %813 = vmatpush.bf16.msra.mxu0 %v762
        %814 = vmatpush.bf16.msra.mxu0 %v761
        %815 = vmatpush.bf16.msra.mxu0 %v760
        %816 = vmatpush.bf16.msra.mxu0 %v759
        %817 = vmatpush.bf16.msra.mxu0 %v758
        %818 = vmatpush.bf16.msra.mxu0 %v757
        %819 = vmatmul.bf16.gmra.mxu0 %v603
        %v820 = vpop.f32.mrf.mxu0
        %v821 = vadd.f32 %v807, %v820
        %v822 = vpop.f32.mrf.mxu0
        %v823 = vadd.f32 %v809, %v822
        %824 = vdwg.mxu0
        %825 = vmatpush.bf16.msra.mxu0 %v772
        %826 = vmatpush.bf16.msra.mxu0 %v771
        %827 = vmatpush.bf16.msra.mxu0 %v770
        %828 = vmatpush.bf16.msra.mxu0 %v769
        %829 = vmatpush.bf16.msra.mxu0 %v768
        %830 = vmatpush.bf16.msra.mxu0 %v767
        %831 = vmatpush.bf16.msra.mxu0 %v766
        %832 = vmatpush.bf16.msra.mxu0 %v765
        %833 = vmatmul.bf16.gmra.mxu0 %v604
        %v834 = vpop.f32.mrf.mxu0
        %v835 = vadd.f32 %v821, %v834
        %v836 = vpop.f32.mrf.mxu0
        %v837 = vadd.f32 %v823, %v836
        %838 = vdwg.mxu0
        %v839 = vpack.c.bf16 %v837, %v835
        %v840 = vld [vmem:[#allocation8] sm:$0xf]
        %v841 = vld [vmem:[#allocation8 + $0x4] sm:$0xf]
        %v842 = vld [vmem:[#allocation8 + $0x8] sm:$0xf]
        %v843 = vld [vmem:[#allocation8 + $0xc] sm:$0xf]
        %v844 = vld [vmem:[#allocation8 + $0x10] sm:$0xf]
        %v845 = vld [vmem:[#allocation8 + $0x14] sm:$0xf]
        %v846 = vld [vmem:[#allocation8 + $0x18] sm:$0xf]
        %v847 = vld [vmem:[#allocation8 + $0x1c] sm:$0xf]
        %v848 = vld [vmem:[#allocation8 + $0x20] sm:$0xf]
        %v849 = vld [vmem:[#allocation8 + $0x24] sm:$0xf]
        %v850 = vld [vmem:[#allocation8 + $0x28] sm:$0xf]
        %v851 = vld [vmem:[#allocation8 + $0x2c] sm:$0xf]
        %v852 = vld [vmem:[#allocation8 + $0x30] sm:$0xf]
        %v853 = vld [vmem:[#allocation8 + $0x34] sm:$0xf]
        %v854 = vld [vmem:[#allocation8 + $0x38] sm:$0xf]
        %v855 = vld [vmem:[#allocation8 + $0x3c] sm:$0xf]
        %v856 = vld [vmem:[%s5] sm:$0x1]
        %v858 = vperm.slane %v856, 0
        %v876 = vunpack.c.l.b16 %v840
        %v877 = vunpack.c.l.b16 %v841
        %v878 = vunpack.c.l.b16 %v842
        %v879 = vunpack.c.l.b16 %v843
        %v880 = vunpack.c.l.b16 %v844
        %v881 = vunpack.c.l.b16 %v845
        %v882 = vunpack.c.l.b16 %v846
        %v883 = vunpack.c.l.b16 %v847
        %v884 = vunpack.c.l.b16 %v848
        %v885 = vunpack.c.l.b16 %v849
        %v886 = vunpack.c.l.b16 %v850
        %v887 = vunpack.c.l.b16 %v851
        %v888 = vunpack.c.l.b16 %v852
        %v889 = vunpack.c.l.b16 %v853
        %v890 = vunpack.c.l.b16 %v854
        %v891 = vunpack.c.l.b16 %v855
        %v892 = vpack.c.b16 %v877, %v876
        %v893 = vpack.c.b16 %v879, %v878
        %v894 = vpack.c.b16 %v881, %v880
        %v895 = vpack.c.b16 %v883, %v882
        %v896 = vpack.c.b16 %v885, %v884
        %v897 = vpack.c.b16 %v887, %v886
        %v898 = vpack.c.b16 %v889, %v888
        %v899 = vpack.c.b16 %v891, %v890
        %908 = vmatpush.bf16.msra.mxu0 %v899
        %909 = vmatpush.bf16.msra.mxu0 %v898
        %910 = vmatpush.bf16.msra.mxu0 %v897
        %911 = vmatpush.bf16.msra.mxu0 %v896
        %912 = vmatpush.bf16.msra.mxu0 %v895
        %913 = vmatpush.bf16.msra.mxu0 %v894
        %914 = vmatpush.bf16.msra.mxu0 %v893
        %915 = vmatpush.bf16.msra.mxu0 %v892
        %916 = vmatmul.bf16.gmra.mxu0 %v839
        %v917 = vpop.f32.mrf.mxu0
        %v918 = vadd.f32 %v858, %v917
        %v919 = vpop.f32.mrf.mxu0
        %v920 = vadd.f32 %v858, %v919
        %921 = vdwg.mxu0
        %922 = vst [vmem:[%s321] sm:$0xff] %v918
        %923 = vst [vmem:[%s321 + $0x8] sm:$0xff] %v920
        %s924 = sand.u32 %s164, 1
        %s925 = scalar_lea.sflag [#allocation4], %s924
        %s926 = sand.u32 %s164, 1
        %s927 = smul.addr %s926, 16
        %s928 = scalar_lea.vmem [#allocation10], %s927
        // Predicated region
        $region61: #{tpu_custom_call.1} parent=43 // pred_check
          %p929 = pneg %p174
        $region62: #{tpu_custom_call.1} parent=43 // pred_check_branch
          %931 = sbr.rel (%p929) target = $region64
        $region63: #{tpu_custom_call.1} parent=43 // pred_region
          %933 = vsyncadd %s925, 0
          %s934 = smul.addr %s25, 2
          %s935 = smul.addr %s934, 8
          %s936 = scalar_lea.hbm %s6, %s935
          %s937 = sshll.u32 %s928, 4
          %s938 = int_to_ptr.vmem [resolvable:$true] %s937
          %s939 = sshll.u32 %s936, 4
          %s940 = int_to_ptr.hbm [resolvable:$true] %s939
          %945 = dma.vmem_to_hbm [thread:$0]  %s938, 256, %s940, %s925, 128, 128, 8
        $region64: #{tpu_custom_call.1} parent=43 // pred_fallthru
          _
      $region44: #{tpu_custom_call.1} parent=5 // pred_fallthru
        _
      %p946 = scmp.le.s32.totalorder 2, %s20
      // Predicated region
      $region65: #{tpu_custom_call.1} parent=5 // pred_check
        %p947 = pneg %p946
      $region66: #{tpu_custom_call.1} parent=5 // pred_check_branch
        %949 = sbr.rel (%p947) target = $region68
      $region67: #{tpu_custom_call.1} parent=5 // pred_region
        %s950 = ssub.s32 %s20, 2
        // Predicated region
        $region69: #{tpu_custom_call.1} parent=67 // pred_check
          %p951 = pneg %p180
        $region70: #{tpu_custom_call.1} parent=67 // pred_check_branch
          %953 = sbr.rel (%p951) target = $region72
        $region71: #{tpu_custom_call.1} parent=67 // pred_region
          %s954 = sand.u32 %s165, 1
          %s955 = scalar_lea.sflag [#allocation4], %s954
          %s956 = sand.u32 %s165, 1
          %s957 = smul.addr %s956, 16
          %s958 = scalar_lea.vmem [#allocation10], %s957
          %960 = dma.done %s955, 256
        $region72: #{tpu_custom_call.1} parent=67 // pred_fallthru
          _
      $region68: #{tpu_custom_call.1} parent=5 // pred_fallthru
        _
    $region6: #{tpu_custom_call.1} parent=1 // loop_footer
      %s24 = sadd.s32 1, %s20
    $region7: #{tpu_custom_call.1} parent=1 // loop_footer_branch
      %19 = sbr.rel target = $region3
    $region8: #{tpu_custom_call.1} parent=1 // loop_exit
      _
    %961 = vsyncpa [#allocation3], 1
    %s962 = scalar_lea.sflag [#allocation3], 1
    %963 = vsyncpa %s962, 1
    %964 = vsyncpa [#allocation6], 1
    %965 = vsyncpa [#allocation9], 1
    %966 = vsyncpa [#allocation4], 1
    %s967 = scalar_lea.sflag [#allocation4], 1
    %968 = vsyncpa %s967, 1

</llo_original>
